<compile_context>
chip_gen: v7x
topology: tpu7x:2x2x1
jax: 0.10.0
libtpu: 0.0.40
codegen_flags: <defaults>
</compile_context>

<pallas_src>
import functools

import jax
import jax.numpy as jnp
from jax import lax
from jax.experimental import pallas as pl
from jax.experimental.pallas import tpu as pltpu

NUM_HIDDEN_LAYERS = 5
LANE = 128
SUBLANE = 8
TB_PREF = 1024  # preferred batch tile (review: 1024-2048, multiple of 256)


def _round_up(n, m):
    return (n + m - 1) // m * m


def _choose_tile(batch):
    """Pick batch tile tb and padded batch so all block shapes are legal and
    the grid has >= 2 steps whenever batch > 128 (v7x megacore)."""
    if batch <= LANE:
        tb = _round_up(max(batch, SUBLANE), SUBLANE)      # single step, full-dim blocks
    elif batch <= 2 * TB_PREF:
        tb = _round_up(batch, 2 * LANE) // 2              # multiple of 128, >= 2 steps
    else:
        tb = TB_PREF
    return tb, _round_up(batch, tb)


# --------------------------------------------------------------------------- #
# Kernel
# --------------------------------------------------------------------------- #
def mlp_kernel(*refs):
    """Fused 6-matmul MLP forward for one batch tile.

    refs: x_ref (tb, in_dim) f32,
          (w_i bf16, b_i f32) * 5  (w1 is (128, 256), rest (256, 256), b (1, 256)),
          w_out (8, 256) bf16, b_out (8, 1) f32,
          o_ref (8, tb) f32,
          xpad_ref (tb, 128) f32 scratch.
    """
    x_ref = refs[0]
    params = refs[1:-2]
    o_ref = refs[-2]
    xpad_ref = refs[-1]

    tb, in_dim = x_ref.shape
    # Two independent half-tiles (MXU/VPU overlap) when the halves stay 128-aligned.
    num_chunks = 2 if (tb % 256 == 0) else 1
    half = tb // num_chunks

    # Stage x into the zero-padded f32 scratch (in-kernel pad; pad lanes are
    # explicitly zeroed — never rely on uninitialized VMEM contents).
    xpad_ref[...] = jnp.zeros_like(xpad_ref)
    xpad_ref[:, :in_dim] = x_ref[...]

    chunks = [
        xpad_ref[c * half:(c + 1) * half, :].astype(jnp.bfloat16)
        for c in range(num_chunks)
    ]

    for i in range(NUM_HIDDEN_LAYERS):
        w = params[2 * i][...]        # bf16 weight (BN folded in)
        b = params[2 * i + 1][...]    # f32 bias   (BN folded in)
        # Issue both chunk matmuls first, then both epilogues -> MXU of one
        # chunk overlaps the VPU bias+ReLU+cast of the other.
        accs = [jnp.dot(h, w, preferred_element_type=jnp.float32) for h in chunks]
        chunks = [
            jnp.maximum(a + b, 0.0).astype(jnp.bfloat16)   # ReLU; Dropout = identity (eval)
            for a in accs
        ]

    w_out = params[-2][...]   # (8, 256) bf16, rows >= out_dim are zero
    b_out = params[-1][...]   # (8, 1)  f32
    for c in range(num_chunks):
        # (8, 256) x (half, 256)^T -> (8, half): lane-dense packed output.
        pre = lax.dot_general(
            w_out, chunks[c],
            dimension_numbers=(((1,), (1,)), ((), ())),
            preferred_element_type=jnp.float32)
        o_ref[:, c * half:(c + 1) * half] = pre + b_out


# --------------------------------------------------------------------------- #
# Wrapper
# --------------------------------------------------------------------------- #
@functools.partial(jax.jit, static_argnames=("out_dim",))
def mlp_forward(x, folded_params, out_dim=1):
    """x: (batch, input_size) f32.  folded_params: output of fold_and_pad_params."""
    batch, in_dim = x.shape
    k_pad = folded_params[0].shape[0]     # padded input features (128)
    n_rows = folded_params[-1].shape[0]   # padded output rows (8)

    tb, batch_p = _choose_tile(batch)
    if batch_p != batch:
        x = jnp.pad(x, ((0, batch_p - batch), (0, 0)))   # rows only; no dtype copy

    grid = (batch_p // tb,)

    in_specs = [pl.BlockSpec((tb, in_dim), lambda i: (i, 0))]   # raw f32, no wrapper pad/cast
    for p in folded_params:
        # Constant index_map -> weights/biases stay VMEM-resident across the grid.
        in_specs.append(pl.BlockSpec(p.shape, lambda i: (0, 0)))

    out = pl.pallas_call(
        mlp_kernel,
        out_shape=jax.ShapeDtypeStruct((n_rows, batch_p), jnp.float32),
        grid=grid,
        in_specs=in_specs,
        out_specs=pl.BlockSpec((n_rows, tb), lambda i: (0, i)),
        scratch_shapes=[pltpu.VMEM((tb, k_pad), jnp.float32)],
        compiler_params=pltpu.CompilerParams(
            # Batch tiles are independent -> shard across TensorCores on v7x.
            dimension_semantics=("parallel",)
        ),
    )(x, *folded_params)

    return out[:out_dim, :batch].T   # (batch, out_dim)


# --------------------------------------------------------------------------- #
# Parameter construction / folding (pure glue, outside the kernel)
# --------------------------------------------------------------------------- #
def init_raw_params(key, input_size, hidden_size, output_size):
    """Synthetic Linear + BatchNorm1d parameters matching the torch module."""
    dims = [input_size] + [hidden_size] * NUM_HIDDEN_LAYERS
    keys = jax.random.split(key, NUM_HIDDEN_LAYERS + 1)
    hidden = []
    for i in range(NUM_HIDDEN_LAYERS):
        fan_in, fan_out = dims[i], dims[i + 1]
        kw, kb, kg, kbe, km, kv = jax.random.split(keys[i], 6)
        bound = 1.0 / (fan_in ** 0.5)
        w = jax.random.uniform(kw, (fan_in, fan_out), jnp.float32, -bound, bound)
        b = jax.random.uniform(kb, (fan_out,), jnp.float32, -bound, bound)
        gamma = 1.0 + 0.1 * jax.random.normal(kg, (fan_out,), jnp.float32)
        beta = 0.1 * jax.random.normal(kbe, (fan_out,), jnp.float32)
        running_mean = 0.05 * jax.random.normal(km, (fan_out,), jnp.float32)
        running_var = 1.0 + 0.1 * jnp.abs(jax.random.normal(kv, (fan_out,), jnp.float32))
        hidden.append((w, b, gamma, beta, running_mean, running_var))
    kw, kb = jax.random.split(keys[-1], 2)
    bound = 1.0 / (hidden_size ** 0.5)
    w_out = jax.random.uniform(kw, (hidden_size, output_size), jnp.float32, -bound, bound)
    b_out = jax.random.uniform(kb, (output_size,), jnp.float32, -bound, bound)
    return hidden, (w_out, b_out)


def fold_and_pad_params(raw, eps=1e-5):
    """Fold eval-mode BN into Linear, pad to TPU-friendly shapes, cast weights to bf16."""
    hidden_layers, (w_out, b_out) = raw
    folded = []
    for li, (w, b, gamma, beta, mean, var) in enumerate(hidden_layers):
        scale = gamma / jnp.sqrt(var + eps)            # (out,)
        shift = beta - mean * scale                    # (out,)
        wf = w * scale[None, :]                        # W' = W * scale
        bf = b * scale + shift                         # b' = b*scale + shift
        if li == 0:
            # Pad input features 100 -> 128 with zero rows (numerically free).
            k_pad = _round_up(wf.shape[0], LANE)
            wf = jnp.pad(wf, ((0, k_pad - wf.shape[0]), (0, 0)))
        folded.append(wf.astype(jnp.bfloat16))
        folded.append(bf[None, :].astype(jnp.float32))
    # Final layer stored transposed so the kernel emits a lane-dense (8, tb) output.
    out_dim = w_out.shape[1]
    n_rows = _round_up(out_dim, SUBLANE)               # 1 -> 8
    w_out_t = jnp.pad(w_out.T, ((0, n_rows - out_dim), (0, 0)))      # (8, 256)
    b_out_p = jnp.pad(b_out, (0, n_rows - out_dim))[:, None]         # (8, 1)
    folded.append(w_out_t.astype(jnp.bfloat16))
    folded.append(b_out_p.astype(jnp.float32))
    return tuple(folded)


# --------------------------------------------------------------------------- #
# References
# --------------------------------------------------------------------------- #
def reference_forward_f32(x, raw, eps=1e-5):
    """Original unfolded f32 semantics (Linear -> BN(eval) -> ReLU -> Dropout(id))."""
    hidden_layers, (w_out, b_out) = raw
    h = x
    for (w, b, gamma, beta, mean, var) in hidden_layers:
        h = h @ w + b
        h = (h - mean) / jnp.sqrt(var + eps) * gamma + beta
        h = jnp.maximum(h, 0.0)
    return h @ w_out + b_out


def reference_forward_bf16(x, folded, out_dim=1):
    """Pure-JAX mirror of the kernel's exact math (folded bf16 params, f32 acc)."""
    in_dim = x.shape[1]
    k_pad = folded[0].shape[0]
    xp = jnp.zeros((x.shape[0], k_pad), jnp.float32).at[:, :in_dim].set(x)
    h = xp.astype(jnp.bfloat16)
    for i in range(NUM_HIDDEN_LAYERS):
        w, b = folded[2 * i], folded[2 * i + 1]
        h32 = jnp.dot(h, w, preferred_element_type=jnp.float32) + b
        h = jnp.maximum(h32, 0.0).astype(jnp.bfloat16)
    pre = lax.dot_general(folded[-2], h, (((1,), (1,)), ((), ())),
                          preferred_element_type=jnp.float32) + folded[-1]
    return pre[:out_dim, :].T


if __name__ == "__main__":
    # Module constants: window_length=100 -> input_size=100, hidden=256, output=1.
    input_size, hidden_size, output_size = 100, 256, 1

    key = jax.random.PRNGKey(0)
    kx, kp, kx2 = jax.random.split(key, 3)
    raw = init_raw_params(kp, input_size, hidden_size, output_size)
    folded = fold_and_pad_params(raw)

    # --- Small demo batch (single grid step, single chunk path). ---
    batch = 8
    x = jax.random.normal(kx, (batch, input_size), jnp.float32)
    out = jax.block_until_ready(mlp_forward(x, folded, out_dim=output_size))
    assert out.shape == (batch, output_size)

    ref_bf16 = reference_forward_bf16(x, folded, output_size)
    assert jnp.allclose(out, ref_bf16, atol=2e-2, rtol=2e-2), (
        float(jnp.max(jnp.abs(out - ref_bf16))))
    ref_f32 = reference_forward_f32(x, raw)
    assert jnp.allclose(out, ref_f32, atol=1e-1, rtol=1e-1), (
        float(jnp.max(jnp.abs(out - ref_f32))))

    # --- Larger batch: exercises grid=2, two-chunk interleave, lane-dense output. ---
    batch2 = 512
    x2 = jax.random.normal(kx2, (batch2, input_size), jnp.float32)
    out2 = jax.block_until_ready(mlp_forward(x2, folded, out_dim=output_size))
    assert out2.shape == (batch2, output_size)
    ref2 = reference_forward_bf16(x2, folded, output_size)
    assert jnp.allclose(out2, ref2, atol=2e-2, rtol=2e-2), (
        float(jnp.max(jnp.abs(out2 - ref2))))

    print("KERNEL_OK")
</pallas_src>

<mosaic_0001>
module attributes {stable_mosaic.version = 11 : i64} {
  func.func @mlp_kernel(%arg0: i32, %arg1: memref<8x100xf32, #tpu.memory_space<vmem>>, %arg2: memref<128x256xbf16, #tpu.memory_space<vmem>>, %arg3: memref<1x256xf32, #tpu.memory_space<vmem>>, %arg4: memref<256x256xbf16, #tpu.memory_space<vmem>>, %arg5: memref<1x256xf32, #tpu.memory_space<vmem>>, %arg6: memref<256x256xbf16, #tpu.memory_space<vmem>>, %arg7: memref<1x256xf32, #tpu.memory_space<vmem>>, %arg8: memref<256x256xbf16, #tpu.memory_space<vmem>>, %arg9: memref<1x256xf32, #tpu.memory_space<vmem>>, %arg10: memref<256x256xbf16, #tpu.memory_space<vmem>>, %arg11: memref<1x256xf32, #tpu.memory_space<vmem>>, %arg12: memref<8x256xbf16, #tpu.memory_space<vmem>>, %arg13: memref<8x1xf32, #tpu.memory_space<vmem>>, %arg14: memref<8x8xf32, #tpu.memory_space<vmem>>, %arg15: memref<8x128xf32, #tpu.memory_space<vmem>>) attributes {dimension_semantics = [#tpu.dimension_semantics<parallel>], iteration_bounds = array<i64: 1>, scalar_prefetch = 0 : i64, scratch_operands = 1 : i64, tpu.core_type = #tpu.core_type<tc>, window_params = [{transform_indices = @transform_0, window_bounds = array<i64: 8, 100>}, {pipeline_mode = #tpu.pipeline_mode<synchronous>, transform_indices = @transform_1, window_bounds = array<i64: 128, 256>}, {pipeline_mode = #tpu.pipeline_mode<synchronous>, transform_indices = @transform_2, window_bounds = array<i64: 1, 256>}, {pipeline_mode = #tpu.pipeline_mode<synchronous>, transform_indices = @transform_3, window_bounds = array<i64: 256, 256>}, {pipeline_mode = #tpu.pipeline_mode<synchronous>, transform_indices = @transform_4, window_bounds = array<i64: 1, 256>}, {pipeline_mode = #tpu.pipeline_mode<synchronous>, transform_indices = @transform_5, window_bounds = array<i64: 256, 256>}, {pipeline_mode = #tpu.pipeline_mode<synchronous>, transform_indices = @transform_6, window_bounds = array<i64: 1, 256>}, {pipeline_mode = #tpu.pipeline_mode<synchronous>, transform_indices = @transform_7, window_bounds = array<i64: 256, 256>}, {pipeline_mode = #tpu.pipeline_mode<synchronous>, transform_indices = @transform_8, window_bounds = array<i64: 1, 256>}, {pipeline_mode = #tpu.pipeline_mode<synchronous>, transform_indices = @transform_9, window_bounds = array<i64: 256, 256>}, {pipeline_mode = #tpu.pipeline_mode<synchronous>, transform_indices = @transform_10, window_bounds = array<i64: 1, 256>}, {pipeline_mode = #tpu.pipeline_mode<synchronous>, transform_indices = @transform_11, window_bounds = array<i64: 8, 256>}, {pipeline_mode = #tpu.pipeline_mode<synchronous>, transform_indices = @transform_12, window_bounds = array<i64: 8, 1>}, {transform_indices = @transform_13, window_bounds = array<i64: 8, 8>}]} {
    %cst = arith.constant 0.000000e+00 : f32
    %0 = vector.broadcast %cst : f32 to vector<8x128xf32>
    %c0 = arith.constant 0 : index
    %c0_0 = arith.constant 0 : index
    %1 = vector.load %arg15[%c0, %c0_0] : memref<8x128xf32, #tpu.memory_space<vmem>>, vector<8x128xf32>
    tpu.vector_store %arg15[%c0, %c0_0], %0 {strides = array<i32>} : memref<8x128xf32, #tpu.memory_space<vmem>>, vector<8x128xf32>,
    %c0_1 = arith.constant 0 : index
    %c0_2 = arith.constant 0 : index
    %2 = vector.load %arg1[%c0_1, %c0_2] : memref<8x100xf32, #tpu.memory_space<vmem>>, vector<8x100xf32>
    %c0_3 = arith.constant 0 : index
    %c0_4 = arith.constant 0 : index
    %3 = vector.load %arg15[%c0_3, %c0_4] : memref<8x128xf32, #tpu.memory_space<vmem>>, vector<8x100xf32>
    tpu.vector_store %arg15[%c0_3, %c0_4], %2 {strides = array<i32>} : memref<8x128xf32, #tpu.memory_space<vmem>>, vector<8x100xf32>,
    %c0_5 = arith.constant 0 : index
    %c0_6 = arith.constant 0 : index
    %4 = vector.load %arg15[%c0_5, %c0_6] : memref<8x128xf32, #tpu.memory_space<vmem>>, vector<8x128xf32>
    %5 = arith.truncf %4 : vector<8x128xf32> to vector<8x128xbf16>
    %c0_7 = arith.constant 0 : index
    %c0_8 = arith.constant 0 : index
    %6 = vector.load %arg2[%c0_7, %c0_8] : memref<128x256xbf16, #tpu.memory_space<vmem>>, vector<128x256xbf16>
    %c0_9 = arith.constant 0 : index
    %c0_10 = arith.constant 0 : index
    %7 = vector.load %arg3[%c0_9, %c0_10] : memref<1x256xf32, #tpu.memory_space<vmem>>, vector<1x256xf32>
    %cst_11 = arith.constant dense<0.000000e+00> : vector<8x256xf32>
    %8 = tpu.matmul %5, %6, %cst_11 {dimension_numbers = #tpu.dot_dimension_numbers<[1], [0], [0], [1], [0, 0, 1, 1], [], []>} : vector<8x128xbf16>, vector<128x256xbf16>, vector<8x256xf32> -> vector<8x256xf32>
    %9 = vector.broadcast %7 : vector<1x256xf32> to vector<8x256xf32>
    %10 = arith.addf %8, %9 : vector<8x256xf32>
    %cst_12 = arith.constant 0.000000e+00 : f32
    %11 = vector.broadcast %cst_12 : f32 to vector<8x256xf32>
    %12 = arith.maximumf %10, %11 : vector<8x256xf32>
    %13 = arith.truncf %12 : vector<8x256xf32> to vector<8x256xbf16>
    %c0_13 = arith.constant 0 : index
    %c0_14 = arith.constant 0 : index
    %14 = vector.load %arg4[%c0_13, %c0_14] : memref<256x256xbf16, #tpu.memory_space<vmem>>, vector<256x256xbf16>
    %c0_15 = arith.constant 0 : index
    %c0_16 = arith.constant 0 : index
    %15 = vector.load %arg5[%c0_15, %c0_16] : memref<1x256xf32, #tpu.memory_space<vmem>>, vector<1x256xf32>
    %cst_17 = arith.constant dense<0.000000e+00> : vector<8x256xf32>
    %16 = tpu.matmul %13, %14, %cst_17 {dimension_numbers = #tpu.dot_dimension_numbers<[1], [0], [0], [1], [0, 0, 1, 1], [], []>} : vector<8x256xbf16>, vector<256x256xbf16>, vector<8x256xf32> -> vector<8x256xf32>
    %17 = vector.broadcast %15 : vector<1x256xf32> to vector<8x256xf32>
    %18 = arith.addf %16, %17 : vector<8x256xf32>
    %cst_18 = arith.constant 0.000000e+00 : f32
    %19 = vector.broadcast %cst_18 : f32 to vector<8x256xf32>
    %20 = arith.maximumf %18, %19 : vector<8x256xf32>
    %21 = arith.truncf %20 : vector<8x256xf32> to vector<8x256xbf16>
    %c0_19 = arith.constant 0 : index
    %c0_20 = arith.constant 0 : index
    %22 = vector.load %arg6[%c0_19, %c0_20] : memref<256x256xbf16, #tpu.memory_space<vmem>>, vector<256x256xbf16>
    %c0_21 = arith.constant 0 : index
    %c0_22 = arith.constant 0 : index
    %23 = vector.load %arg7[%c0_21, %c0_22] : memref<1x256xf32, #tpu.memory_space<vmem>>, vector<1x256xf32>
    %cst_23 = arith.constant dense<0.000000e+00> : vector<8x256xf32>
    %24 = tpu.matmul %21, %22, %cst_23 {dimension_numbers = #tpu.dot_dimension_numbers<[1], [0], [0], [1], [0, 0, 1, 1], [], []>} : vector<8x256xbf16>, vector<256x256xbf16>, vector<8x256xf32> -> vector<8x256xf32>
    %25 = vector.broadcast %23 : vector<1x256xf32> to vector<8x256xf32>
    %26 = arith.addf %24, %25 : vector<8x256xf32>
    %cst_24 = arith.constant 0.000000e+00 : f32
    %27 = vector.broadcast %cst_24 : f32 to vector<8x256xf32>
    %28 = arith.maximumf %26, %27 : vector<8x256xf32>
    %29 = arith.truncf %28 : vector<8x256xf32> to vector<8x256xbf16>
    %c0_25 = arith.constant 0 : index
    %c0_26 = arith.constant 0 : index
    %30 = vector.load %arg8[%c0_25, %c0_26] : memref<256x256xbf16, #tpu.memory_space<vmem>>, vector<256x256xbf16>
    %c0_27 = arith.constant 0 : index
    %c0_28 = arith.constant 0 : index
    %31 = vector.load %arg9[%c0_27, %c0_28] : memref<1x256xf32, #tpu.memory_space<vmem>>, vector<1x256xf32>
    %cst_29 = arith.constant dense<0.000000e+00> : vector<8x256xf32>
    %32 = tpu.matmul %29, %30, %cst_29 {dimension_numbers = #tpu.dot_dimension_numbers<[1], [0], [0], [1], [0, 0, 1, 1], [], []>} : vector<8x256xbf16>, vector<256x256xbf16>, vector<8x256xf32> -> vector<8x256xf32>
    %33 = vector.broadcast %31 : vector<1x256xf32> to vector<8x256xf32>
    %34 = arith.addf %32, %33 : vector<8x256xf32>
    %cst_30 = arith.constant 0.000000e+00 : f32
    %35 = vector.broadcast %cst_30 : f32 to vector<8x256xf32>
    %36 = arith.maximumf %34, %35 : vector<8x256xf32>
    %37 = arith.truncf %36 : vector<8x256xf32> to vector<8x256xbf16>
    %c0_31 = arith.constant 0 : index
    %c0_32 = arith.constant 0 : index
    %38 = vector.load %arg10[%c0_31, %c0_32] : memref<256x256xbf16, #tpu.memory_space<vmem>>, vector<256x256xbf16>
    %c0_33 = arith.constant 0 : index
    %c0_34 = arith.constant 0 : index
    %39 = vector.load %arg11[%c0_33, %c0_34] : memref<1x256xf32, #tpu.memory_space<vmem>>, vector<1x256xf32>
    %cst_35 = arith.constant dense<0.000000e+00> : vector<8x256xf32>
    %40 = tpu.matmul %37, %38, %cst_35 {dimension_numbers = #tpu.dot_dimension_numbers<[1], [0], [0], [1], [0, 0, 1, 1], [], []>} : vector<8x256xbf16>, vector<256x256xbf16>, vector<8x256xf32> -> vector<8x256xf32>
    %41 = vector.broadcast %39 : vector<1x256xf32> to vector<8x256xf32>
    %42 = arith.addf %40, %41 : vector<8x256xf32>
    %cst_36 = arith.constant 0.000000e+00 : f32
    %43 = vector.broadcast %cst_36 : f32 to vector<8x256xf32>
    %44 = arith.maximumf %42, %43 : vector<8x256xf32>
    %45 = arith.truncf %44 : vector<8x256xf32> to vector<8x256xbf16>
    %c0_37 = arith.constant 0 : index
    %c0_38 = arith.constant 0 : index
    %46 = vector.load %arg12[%c0_37, %c0_38] : memref<8x256xbf16, #tpu.memory_space<vmem>>, vector<8x256xbf16>
    %c0_39 = arith.constant 0 : index
    %c0_40 = arith.constant 0 : index
    %47 = vector.load %arg13[%c0_39, %c0_40] : memref<8x1xf32, #tpu.memory_space<vmem>>, vector<8x1xf32>
    %cst_41 = arith.constant dense<0.000000e+00> : vector<8x8xf32>
    %48 = tpu.matmul %46, %45, %cst_41 {dimension_numbers = #tpu.dot_dimension_numbers<[1], [1], [0], [0], [0, 0, 1, 0], [], []>} : vector<8x256xbf16>, vector<8x256xbf16>, vector<8x8xf32> -> vector<8x8xf32>
    %49 = vector.broadcast %47 : vector<8x1xf32> to vector<8x8xf32>
    %50 = arith.addf %48, %49 : vector<8x8xf32>
    %c0_42 = arith.constant 0 : index
    %c0_43 = arith.constant 0 : index
    %51 = vector.load %arg14[%c0_42, %c0_43] : memref<8x8xf32, #tpu.memory_space<vmem>>, vector<8x8xf32>
    tpu.vector_store %arg14[%c0_42, %c0_43], %50 {strides = array<i32>} : memref<8x8xf32, #tpu.memory_space<vmem>>, vector<8x8xf32>,
    return
  }
  func.func @transform_0(%arg0: i32) -> (i32, i32) {
    %c0_i32 = arith.constant 0 : i32
    %c0_i32_0 = arith.constant 0 : i32
    return %arg0, %c0_i32 : i32, i32
  }
  func.func @transform_1(%arg0: i32) -> (i32, i32) {
    %c0_i32 = arith.constant 0 : i32
    %c0_i32_0 = arith.constant 0 : i32
    %c0_i32_1 = arith.constant 0 : i32
    return %c0_i32, %c0_i32_0 : i32, i32
  }
  func.func @transform_2(%arg0: i32) -> (i32, i32) {
    %c0_i32 = arith.constant 0 : i32
    %c0_i32_0 = arith.constant 0 : i32
    %c0_i32_1 = arith.constant 0 : i32
    return %c0_i32, %c0_i32_0 : i32, i32
  }
  func.func @transform_3(%arg0: i32) -> (i32, i32) {
    %c0_i32 = arith.constant 0 : i32
    %c0_i32_0 = arith.constant 0 : i32
    %c0_i32_1 = arith.constant 0 : i32
    return %c0_i32, %c0_i32_0 : i32, i32
  }
  func.func @transform_4(%arg0: i32) -> (i32, i32) {
    %c0_i32 = arith.constant 0 : i32
    %c0_i32_0 = arith.constant 0 : i32
    %c0_i32_1 = arith.constant 0 : i32
    return %c0_i32, %c0_i32_0 : i32, i32
  }
  func.func @transform_5(%arg0: i32) -> (i32, i32) {
    %c0_i32 = arith.constant 0 : i32
    %c0_i32_0 = arith.constant 0 : i32
    %c0_i32_1 = arith.constant 0 : i32
    return %c0_i32, %c0_i32_0 : i32, i32
  }
  func.func @transform_6(%arg0: i32) -> (i32, i32) {
    %c0_i32 = arith.constant 0 : i32
    %c0_i32_0 = arith.constant 0 : i32
    %c0_i32_1 = arith.constant 0 : i32
    return %c0_i32, %c0_i32_0 : i32, i32
  }
  func.func @transform_7(%arg0: i32) -> (i32, i32) {
    %c0_i32 = arith.constant 0 : i32
    %c0_i32_0 = arith.constant 0 : i32
    %c0_i32_1 = arith.constant 0 : i32
    return %c0_i32, %c0_i32_0 : i32, i32
  }
  func.func @transform_8(%arg0: i32) -> (i32, i32) {
    %c0_i32 = arith.constant 0 : i32
    %c0_i32_0 = arith.constant 0 : i32
    %c0_i32_1 = arith.constant 0 : i32
    return %c0_i32, %c0_i32_0 : i32, i32
  }
  func.func @transform_9(%arg0: i32) -> (i32, i32) {
    %c0_i32 = arith.constant 0 : i32
    %c0_i32_0 = arith.constant 0 : i32
    %c0_i32_1 = arith.constant 0 : i32
    return %c0_i32, %c0_i32_0 : i32, i32
  }
  func.func @transform_10(%arg0: i32) -> (i32, i32) {
    %c0_i32 = arith.constant 0 : i32
    %c0_i32_0 = arith.constant 0 : i32
    %c0_i32_1 = arith.constant 0 : i32
    return %c0_i32, %c0_i32_0 : i32, i32
  }
  func.func @transform_11(%arg0: i32) -> (i32, i32) {
    %c0_i32 = arith.constant 0 : i32
    %c0_i32_0 = arith.constant 0 : i32
    %c0_i32_1 = arith.constant 0 : i32
    return %c0_i32, %c0_i32_0 : i32, i32
  }
  func.func @transform_12(%arg0: i32) -> (i32, i32) {
    %c0_i32 = arith.constant 0 : i32
    %c0_i32_0 = arith.constant 0 : i32
    %c0_i32_1 = arith.constant 0 : i32
    return %c0_i32, %c0_i32_0 : i32, i32
  }
  func.func @transform_13(%arg0: i32) -> (i32, i32) {
    %c0_i32 = arith.constant 0 : i32
    %c0_i32_0 = arith.constant 0 : i32
    return %c0_i32, %arg0 : i32, i32
  }
}

</mosaic_0001>

<llo_original>
// kernel: mlp_forward.1
$region0: #{mlp_forward.1}
  #allocation0 [shape = 'u32[]', space=smem, size = 0x4, offset = 0x4, fixed_abs, tag = 'smem constant byte address 0x4 - core index']
  #allocation1 [shape = 'u32[144,128]{1,0:T(1,128)}', space=vmem, size = 0x12000, scoped, tag = 'internal scratch']
  #allocation2 [shape = 'f32[8,128]{1,0:T(8,128)}', space=vmem, size = 0x1000, scoped, tag = 'scratch operand']
  %s0 = inlined_call_operand.vmem [shape: f32[8,100], index: 0, kind: input, shape index: {}]
  %s1 = inlined_call_operand.hbm [shape: bf16[128,256], index: 1, kind: input, shape index: {}]
  %s2 = inlined_call_operand.hbm [shape: f32[1,256], index: 2, kind: input, shape index: {}]
  %s3 = inlined_call_operand.hbm [shape: bf16[256,256], index: 3, kind: input, shape index: {}]
  %s4 = inlined_call_operand.vmem [shape: f32[1,256], index: 4, kind: input, shape index: {}]
  %s5 = inlined_call_operand.hbm [shape: bf16[256,256], index: 5, kind: input, shape index: {}]
  %s6 = inlined_call_operand.vmem [shape: f32[1,256], index: 6, kind: input, shape index: {}]
  %s7 = inlined_call_operand.hbm [shape: bf16[256,256], index: 7, kind: input, shape index: {}]
  %s8 = inlined_call_operand.vmem [shape: f32[1,256], index: 8, kind: input, shape index: {}]
  %s9 = inlined_call_operand.hbm [shape: bf16[256,256], index: 9, kind: input, shape index: {}]
  %s10 = inlined_call_operand.vmem [shape: f32[1,256], index: 10, kind: input, shape index: {}]
  %s11 = inlined_call_operand.vmem [shape: bf16[8,256], index: 11, kind: input, shape index: {}]
  %s12 = inlined_call_operand.vmem [shape: f32[8,1], index: 12, kind: input, shape index: {}]
  %s13 = inlined_call_operand.vmem [shape: f32[8,8], index: 13, kind: output, shape index: {}]
  %s14 = sld [smem:[#allocation0]]
  $region86: #{mlp_forward.1} parent=0
    _
  %s16 = ssub.s32 1, %s14
  %s17 = scalar_select 0, %s16, %s14
  $region1: #{mlp_forward.1} parent=0
    #allocation3 [shape = 'u8[65536]{0}', space=vmem, size = 0x10000, scoped, tag = 'input window, operand 1, single buffered']
    #allocation4 [shape = 's32[1]{0}', space=sflag, size = 0x4, scoped, tag = 'scoped memory for mlp_forward.1']
    #allocation5 [shape = 'u8[1024]{0}', space=vmem, size = 0x400, scoped, tag = 'input window, operand 2, single buffered']
    #allocation6 [shape = 's32[1]{0}', space=sflag, size = 0x4, scoped, tag = 'scoped memory for mlp_forward.1']
    #allocation7 [shape = 'u8[131072]{0}', space=vmem, size = 0x20000, scoped, tag = 'input window, operand 3, single buffered']
    #allocation8 [shape = 'u8[131072]{0}', space=vmem, size = 0x20000, scoped, tag = 'input window, operand 5, single buffered']
    #allocation9 [shape = 's32[1]{0}', space=sflag, size = 0x4, scoped, tag = 'scoped memory for mlp_forward.1']
    #allocation10 [shape = 'u8[131072]{0}', space=vmem, size = 0x20000, scoped, tag = 'input window, operand 7, single buffered']
    #allocation11 [shape = 'u8[131072]{0}', space=vmem, size = 0x20000, scoped, tag = 'input window, operand 9, single buffered']
    #allocation12 [shape = 's32[1]{0}', space=sflag, size = 0x4, scoped, tag = 'scoped memory for mlp_forward.1']
    %18 = vsyncpa [#allocation4], 0
    %19 = vsyncpa [#allocation6], 0
    %20 = vsyncpa [#allocation9], 0
    %21 = vsyncpa [#allocation12], 0
    // Predicated region
    $region2: #{mlp_forward.1} parent=1 // pred_check
      _
    $region3: #{mlp_forward.1} parent=1 // pred_check_branch
      %23 = sbr.rel (0) target = $region5
    $region4: #{mlp_forward.1} parent=1 // pred_region
      _
    $region5: #{mlp_forward.1} parent=1 // pred_fallthru
      _
    // Predicated region
    $region6: #{mlp_forward.1} parent=1 // pred_check
      _
    $region7: #{mlp_forward.1} parent=1 // pred_check_branch
      %25 = sbr.rel (0) target = $region9
    $region8: #{mlp_forward.1} parent=1 // pred_region
      %s27 = ssub.s32 2048, 2048
      %28 = vsyncadd [#allocation4], %s27
      %s29 = sshll.u32 [#allocation3], 4
      %s30 = int_to_ptr.vmem [resolvable:$true] %s29
      %35 = dma.hbm_to_vmem [thread:$0]  %s1, 2048, %s30, [#allocation4], 128, 128, 8
    $region9: #{mlp_forward.1} parent=1 // pred_fallthru
      _
    // Predicated region
    $region10: #{mlp_forward.1} parent=1 // pred_check
      _
    $region11: #{mlp_forward.1} parent=1 // pred_check_branch
      %37 = sbr.rel (0) target = $region13
    $region12: #{mlp_forward.1} parent=1 // pred_region
      %s39 = ssub.s32 32, 32
      %40 = vsyncadd [#allocation6], %s39
      %s42 = sshll.u32 [#allocation5], 4
      %s43 = int_to_ptr.vmem [resolvable:$true] %s42
      %45 = dma.hbm_to_vmem [thread:$0]  %s2, 32, %s43, [#allocation6]
    $region13: #{mlp_forward.1} parent=1 // pred_fallthru
      _
    // Predicated region
    $region14: #{mlp_forward.1} parent=1 // pred_check
      _
    $region15: #{mlp_forward.1} parent=1 // pred_check_branch
      %47 = sbr.rel (0) target = $region17
    $region16: #{mlp_forward.1} parent=1 // pred_region
      %s49 = ssub.s32 4096, 4096
      %50 = vsyncadd [#allocation6], %s49
      %s51 = sshll.u32 [#allocation7], 4
      %s52 = int_to_ptr.vmem [resolvable:$true] %s51
      %57 = dma.hbm_to_vmem [thread:$0]  %s3, 4096, %s52, [#allocation6], 128, 128, 8
    $region17: #{mlp_forward.1} parent=1 // pred_fallthru
      _
    // Predicated region
    $region18: #{mlp_forward.1} parent=1 // pred_check
      _
    $region19: #{mlp_forward.1} parent=1 // pred_check_branch
      %59 = sbr.rel (0) target = $region21
    $region20: #{mlp_forward.1} parent=1 // pred_region
      _
    $region21: #{mlp_forward.1} parent=1 // pred_fallthru
      _
    // Predicated region
    $region22: #{mlp_forward.1} parent=1 // pred_check
      _
    $region23: #{mlp_forward.1} parent=1 // pred_check_branch
      %61 = sbr.rel (0) target = $region25
    $region24: #{mlp_forward.1} parent=1 // pred_region
      %s63 = ssub.s32 4096, 4096
      %64 = vsyncadd [#allocation9], %s63
      %s65 = sshll.u32 [#allocation8], 4
      %s66 = int_to_ptr.vmem [resolvable:$true] %s65
      %71 = dma.hbm_to_vmem [thread:$0]  %s5, 4096, %s66, [#allocation9], 128, 128, 8
    $region25: #{mlp_forward.1} parent=1 // pred_fallthru
      _
    // Predicated region
    $region26: #{mlp_forward.1} parent=1 // pred_check
      _
    $region27: #{mlp_forward.1} parent=1 // pred_check_branch
      %73 = sbr.rel (0) target = $region29
    $region28: #{mlp_forward.1} parent=1 // pred_region
      _
    $region29: #{mlp_forward.1} parent=1 // pred_fallthru
      _
    // Predicated region
    $region30: #{mlp_forward.1} parent=1 // pred_check
      _
    $region31: #{mlp_forward.1} parent=1 // pred_check_branch
      %75 = sbr.rel (0) target = $region33
    $region32: #{mlp_forward.1} parent=1 // pred_region
      %s77 = ssub.s32 4096, 4096
      %78 = vsyncadd [#allocation9], %s77
      %s79 = sshll.u32 [#allocation10], 4
      %s80 = int_to_ptr.vmem [resolvable:$true] %s79
      %85 = dma.hbm_to_vmem [thread:$0]  %s7, 4096, %s80, [#allocation9], 128, 128, 8
    $region33: #{mlp_forward.1} parent=1 // pred_fallthru
      _
    // Predicated region
    $region34: #{mlp_forward.1} parent=1 // pred_check
      _
    $region35: #{mlp_forward.1} parent=1 // pred_check_branch
      %87 = sbr.rel (0) target = $region37
    $region36: #{mlp_forward.1} parent=1 // pred_region
      _
    $region37: #{mlp_forward.1} parent=1 // pred_fallthru
      _
    // Predicated region
    $region38: #{mlp_forward.1} parent=1 // pred_check
      _
    $region39: #{mlp_forward.1} parent=1 // pred_check_branch
      %89 = sbr.rel (0) target = $region41
    $region40: #{mlp_forward.1} parent=1 // pred_region
      %s91 = ssub.s32 4096, 4096
      %92 = vsyncadd [#allocation12], %s91
      %s93 = sshll.u32 [#allocation11], 4
      %s94 = int_to_ptr.vmem [resolvable:$true] %s93
      %99 = dma.hbm_to_vmem [thread:$0]  %s9, 4096, %s94, [#allocation12], 128, 128, 8
    $region41: #{mlp_forward.1} parent=1 // pred_fallthru
      _
    // Predicated region
    $region42: #{mlp_forward.1} parent=1 // pred_check
      _
    $region43: #{mlp_forward.1} parent=1 // pred_check_branch
      %101 = sbr.rel (0) target = $region45
    $region44: #{mlp_forward.1} parent=1 // pred_region
      _
    $region45: #{mlp_forward.1} parent=1 // pred_fallthru
      _
    // Predicated region
    $region46: #{mlp_forward.1} parent=1 // pred_check
      _
    $region47: #{mlp_forward.1} parent=1 // pred_check_branch
      %103 = sbr.rel (0) target = $region49
    $region48: #{mlp_forward.1} parent=1 // pred_region
      _
    $region49: #{mlp_forward.1} parent=1 // pred_fallthru
      _
    // Predicated region
    $region50: #{mlp_forward.1} parent=1 // pred_check
      _
    $region51: #{mlp_forward.1} parent=1 // pred_check_branch
      %105 = sbr.rel (0) target = $region53
    $region52: #{mlp_forward.1} parent=1 // pred_region
      _
    $region53: #{mlp_forward.1} parent=1 // pred_fallthru
      _
    // Predicated region
    $region54: #{mlp_forward.1} parent=1 // pred_check
      _
    $region55: #{mlp_forward.1} parent=1 // pred_check_branch
      %107 = sbr.rel (0) target = $region57
    $region56: #{mlp_forward.1} parent=1 // pred_region
      %108 = dma.done [#allocation4], 2048
    $region57: #{mlp_forward.1} parent=1 // pred_fallthru
      _
    // Predicated region
    $region58: #{mlp_forward.1} parent=1 // pred_check
      _
    $region59: #{mlp_forward.1} parent=1 // pred_check_branch
      %110 = sbr.rel (0) target = $region61
    $region60: #{mlp_forward.1} parent=1 // pred_region
      %111 = dma.done [#allocation6], 32
    $region61: #{mlp_forward.1} parent=1 // pred_fallthru
      _
    // Predicated region
    $region62: #{mlp_forward.1} parent=1 // pred_check
      _
    $region63: #{mlp_forward.1} parent=1 // pred_check_branch
      %113 = sbr.rel (0) target = $region65
    $region64: #{mlp_forward.1} parent=1 // pred_region
      %114 = dma.done [#allocation6], 4096
    $region65: #{mlp_forward.1} parent=1 // pred_fallthru
      _
    // Predicated region
    $region66: #{mlp_forward.1} parent=1 // pred_check
      _
    $region67: #{mlp_forward.1} parent=1 // pred_check_branch
      %116 = sbr.rel (0) target = $region69
    $region68: #{mlp_forward.1} parent=1 // pred_region
      %117 = dma.done [#allocation9], 4096
    $region69: #{mlp_forward.1} parent=1 // pred_fallthru
      _
    // Predicated region
    $region70: #{mlp_forward.1} parent=1 // pred_check
      _
    $region71: #{mlp_forward.1} parent=1 // pred_check_branch
      %119 = sbr.rel (0) target = $region73
    $region72: #{mlp_forward.1} parent=1 // pred_region
      %120 = dma.done [#allocation9], 4096
    $region73: #{mlp_forward.1} parent=1 // pred_fallthru
      _
    // Predicated region
    $region74: #{mlp_forward.1} parent=1 // pred_check
      _
    $region75: #{mlp_forward.1} parent=1 // pred_check_branch
      %122 = sbr.rel (0) target = $region77
    $region76: #{mlp_forward.1} parent=1 // pred_region
      %123 = dma.done [#allocation12], 4096
    $region77: #{mlp_forward.1} parent=1 // pred_fallthru
      _
    %125 = vst [vmem:[#allocation2] sm:$0xff] 0.0
    %v126 = vld [vmem:[%s0] sm:$0xff]
    %vm127 = vcmask 818176
    %128 = vst.msk [vmem:[#allocation2] sm:$0xff] %vm127, %v126
    %v129 = vld [vmem:[#allocation2] sm:$0xff]
    %v130 = vpack.c.bf16 %v129, %v129
    %v131 = vld [vmem:[#allocation3] sm:$0xff]
    %v132 = vld [vmem:[#allocation3 + $0x8] sm:$0xff]
    %v133 = vld [vmem:[#allocation3 + $0x10] sm:$0xff]
    %v134 = vld [vmem:[#allocation3 + $0x18] sm:$0xff]
    %v135 = vld [vmem:[#allocation3 + $0x20] sm:$0xff]
    %v136 = vld [vmem:[#allocation3 + $0x28] sm:$0xff]
    %v137 = vld [vmem:[#allocation3 + $0x30] sm:$0xff]
    %v138 = vld [vmem:[#allocation3 + $0x38] sm:$0xff]
    %v139 = vld [vmem:[#allocation3 + $0x40] sm:$0xff]
    %v140 = vld [vmem:[#allocation3 + $0x48] sm:$0xff]
    %v141 = vld [vmem:[#allocation3 + $0x50] sm:$0xff]
    %v142 = vld [vmem:[#allocation3 + $0x58] sm:$0xff]
    %v143 = vld [vmem:[#allocation3 + $0x60] sm:$0xff]
    %v144 = vld [vmem:[#allocation3 + $0x68] sm:$0xff]
    %v145 = vld [vmem:[#allocation3 + $0x70] sm:$0xff]
    %v146 = vld [vmem:[#allocation3 + $0x78] sm:$0xff]
    %v147 = vld [vmem:[#allocation5] sm:$0x3]
    %v149 = vlaneseq
    %v150 = vshrl.u32 %v149, 7
    %v151 = vsub.s32 0, %v150
    %v152 = vrot.slane %v147, %v151
    %v153 = vlaneseq
    %v154 = vshrl.u32 %v153, 7
    %v155 = vsub.s32 1, %v154
    %v156 = vrot.slane %v147, %v155
    %v175 = vunpack.c.l.b16 %v131
    %v176 = vunpack.c.h.b16 %v131
    %v177 = vunpack.c.l.b16 %v132
    %v178 = vunpack.c.h.b16 %v132
    %v179 = vunpack.c.l.b16 %v133
    %v180 = vunpack.c.h.b16 %v133
    %v181 = vunpack.c.l.b16 %v134
    %v182 = vunpack.c.h.b16 %v134
    %v183 = vunpack.c.l.b16 %v135
    %v184 = vunpack.c.h.b16 %v135
    %v185 = vunpack.c.l.b16 %v136
    %v186 = vunpack.c.h.b16 %v136
    %v187 = vunpack.c.l.b16 %v137
    %v188 = vunpack.c.h.b16 %v137
    %v189 = vunpack.c.l.b16 %v138
    %v190 = vunpack.c.h.b16 %v138
    %v191 = vunpack.c.l.b16 %v139
    %v192 = vunpack.c.h.b16 %v139
    %v193 = vunpack.c.l.b16 %v140
    %v194 = vunpack.c.h.b16 %v140
    %v195 = vunpack.c.l.b16 %v141
    %v196 = vunpack.c.h.b16 %v141
    %v197 = vunpack.c.l.b16 %v142
    %v198 = vunpack.c.h.b16 %v142
    %v199 = vunpack.c.l.b16 %v143
    %v200 = vunpack.c.h.b16 %v143
    %v201 = vunpack.c.l.b16 %v144
    %v202 = vunpack.c.h.b16 %v144
    %v203 = vunpack.c.l.b16 %v145
    %v204 = vunpack.c.h.b16 %v145
    %v205 = vunpack.c.l.b16 %v146
    %v206 = vunpack.c.h.b16 %v146
    %v207 = vpack.c.b16 %v177, %v175
    %v208 = vpack.c.b16 %v178, %v176
    %v209 = vpack.c.b16 %v181, %v179
    %v210 = vpack.c.b16 %v182, %v180
    %v211 = vpack.c.b16 %v185, %v183
    %v212 = vpack.c.b16 %v186, %v184
    %v213 = vpack.c.b16 %v189, %v187
    %v214 = vpack.c.b16 %v190, %v188
    %v215 = vpack.c.b16 %v193, %v191
    %v216 = vpack.c.b16 %v194, %v192
    %v217 = vpack.c.b16 %v197, %v195
    %v218 = vpack.c.b16 %v198, %v196
    %v219 = vpack.c.b16 %v201, %v199
    %v220 = vpack.c.b16 %v202, %v200
    %v221 = vpack.c.b16 %v205, %v203
    %v222 = vpack.c.b16 %v206, %v204
    %239 = vmatprep.subr.bf16.mxu0 %v208
    %240 = vmatpush1.bf16.msra.mxu0 %v207
    %241 = vmatprep.subr.bf16.mxu0 %v210
    %242 = vmatpush1.bf16.msra.mxu0 %v209
    %243 = vmatprep.subr.bf16.mxu0 %v212
    %244 = vmatpush1.bf16.msra.mxu0 %v211
    %245 = vmatprep.subr.bf16.mxu0 %v214
    %246 = vmatpush1.bf16.msra.mxu0 %v213
    %247 = vmatprep.subr.bf16.mxu0 %v216
    %248 = vmatpush1.bf16.msra.mxu0 %v215
    %249 = vmatprep.subr.bf16.mxu0 %v218
    %250 = vmatpush1.bf16.msra.mxu0 %v217
    %251 = vmatprep.subr.bf16.mxu0 %v220
    %252 = vmatpush1.bf16.msra.mxu0 %v219
    %253 = vmatprep.subr.bf16.mxu0 %v222
    %254 = vmatpush1.bf16.msra.mxu0 %v221
    %255 = vmatprep.subr.bf16.mxu0 0
    %256 = vmatpush1.bf16.msra.mxu0 0
    %257 = vmatprep.subr.bf16.mxu0 0
    %258 = vmatpush1.bf16.msra.mxu0 0
    %259 = vmatprep.subr.bf16.mxu0 0
    %260 = vmatpush1.bf16.msra.mxu0 0
    %261 = vmatprep.subr.bf16.mxu0 0
    %262 = vmatpush1.bf16.msra.mxu0 0
    %263 = vmatprep.subr.bf16.mxu0 0
    %264 = vmatpush1.bf16.msra.mxu0 0
    %265 = vmatprep.subr.bf16.mxu0 0
    %266 = vmatpush1.bf16.msra.mxu0 0
    %267 = vmatprep.subr.bf16.mxu0 0
    %268 = vmatpush1.bf16.msra.mxu0 0
    %269 = vmatprep.subr.bf16.mxu0 0
    %270 = vmatpush1.bf16.msra.mxu0 0
    %271 = vmatprep.mubr.bf16.mxu0 0
    %272 = vmatmul.mubr.bf16.gmra.mrb[0].mxu0 %v130
    %v273 = vpop.f32.mrb[0].mxu0
    %v274 = vadd.f32 %v152, %v273
    %v275 = vpop.f32.mrb[0].mxu0
    %v276 = vadd.f32 %v156, %v275
    %v277 = vpop.f32.mrb[0].mxu0
    %v278 = vpop.f32.mrb[0].mxu0
    %279 = vdwg.mxu0
    %v280 = vmax.f32 %v274, 0.0
    %v281 = vmax.f32 %v276, 0.0
    %v282 = vpack.c.bf16 %v280, %v280
    %v283 = vpack.c.bf16 %v281, %v281
    %v284 = vld [vmem:[#allocation7] sm:$0xff]
    %v285 = vld [vmem:[#allocation7 + $0x8] sm:$0xff]
    %v286 = vld [vmem:[#allocation7 + $0x10] sm:$0xff]
    %v287 = vld [vmem:[#allocation7 + $0x18] sm:$0xff]
    %v288 = vld [vmem:[#allocation7 + $0x20] sm:$0xff]
    %v289 = vld [vmem:[#allocation7 + $0x28] sm:$0xff]
    %v290 = vld [vmem:[#allocation7 + $0x30] sm:$0xff]
    %v291 = vld [vmem:[#allocation7 + $0x38] sm:$0xff]
    %v292 = vld [vmem:[#allocation7 + $0x40] sm:$0xff]
    %v293 = vld [vmem:[#allocation7 + $0x48] sm:$0xff]
    %v294 = vld [vmem:[#allocation7 + $0x50] sm:$0xff]
    %v295 = vld [vmem:[#allocation7 + $0x58] sm:$0xff]
    %v296 = vld [vmem:[#allocation7 + $0x60] sm:$0xff]
    %v297 = vld [vmem:[#allocation7 + $0x68] sm:$0xff]
    %v298 = vld [vmem:[#allocation7 + $0x70] sm:$0xff]
    %v299 = vld [vmem:[#allocation7 + $0x78] sm:$0xff]
    %v300 = vld [vmem:[#allocation7 + $0x80] sm:$0xff]
    %v301 = vld [vmem:[#allocation7 + $0x88] sm:$0xff]
    %v302 = vld [vmem:[#allocation7 + $0x90] sm:$0xff]
    %v303 = vld [vmem:[#allocation7 + $0x98] sm:$0xff]
    %v304 = vld [vmem:[#allocation7 + $0xa0] sm:$0xff]
    %v305 = vld [vmem:[#allocation7 + $0xa8] sm:$0xff]
    %v306 = vld [vmem:[#allocation7 + $0xb0] sm:$0xff]
    %v307 = vld [vmem:[#allocation7 + $0xb8] sm:$0xff]
    %v308 = vld [vmem:[#allocation7 + $0xc0] sm:$0xff]
    %v309 = vld [vmem:[#allocation7 + $0xc8] sm:$0xff]
    %v310 = vld [vmem:[#allocation7 + $0xd0] sm:$0xff]
    %v311 = vld [vmem:[#allocation7 + $0xd8] sm:$0xff]
    %v312 = vld [vmem:[#allocation7 + $0xe0] sm:$0xff]
    %v313 = vld [vmem:[#allocation7 + $0xe8] sm:$0xff]
    %v314 = vld [vmem:[#allocation7 + $0xf0] sm:$0xff]
    %v315 = vld [vmem:[#allocation7 + $0xf8] sm:$0xff]
    %v316 = vld [vmem:[%s4] sm:$0x3]
    %v318 = vlaneseq
    %v319 = vshrl.u32 %v318, 7
    %v320 = vsub.s32 0, %v319
    %v321 = vrot.slane %v316, %v320
    %v322 = vlaneseq
    %v323 = vshrl.u32 %v322, 7
    %v324 = vsub.s32 1, %v323
    %v325 = vrot.slane %v316, %v324
    %v360 = vunpack.c.l.b16 %v284
    %v361 = vunpack.c.h.b16 %v284
    %v362 = vunpack.c.l.b16 %v285
    %v363 = vunpack.c.h.b16 %v285
    %v364 = vunpack.c.l.b16 %v286
    %v365 = vunpack.c.h.b16 %v286
    %v366 = vunpack.c.l.b16 %v287
    %v367 = vunpack.c.h.b16 %v287
    %v368 = vunpack.c.l.b16 %v288
    %v369 = vunpack.c.h.b16 %v288
    %v370 = vunpack.c.l.b16 %v289
    %v371 = vunpack.c.h.b16 %v289
    %v372 = vunpack.c.l.b16 %v290
    %v373 = vunpack.c.h.b16 %v290
    %v374 = vunpack.c.l.b16 %v291
    %v375 = vunpack.c.h.b16 %v291
    %v376 = vunpack.c.l.b16 %v292
    %v377 = vunpack.c.h.b16 %v292
    %v378 = vunpack.c.l.b16 %v293
    %v379 = vunpack.c.h.b16 %v293
    %v380 = vunpack.c.l.b16 %v294
    %v381 = vunpack.c.h.b16 %v294
    %v382 = vunpack.c.l.b16 %v295
    %v383 = vunpack.c.h.b16 %v295
    %v384 = vunpack.c.l.b16 %v296
    %v385 = vunpack.c.h.b16 %v296
    %v386 = vunpack.c.l.b16 %v297
    %v387 = vunpack.c.h.b16 %v297
    %v388 = vunpack.c.l.b16 %v298
    %v389 = vunpack.c.h.b16 %v298
    %v390 = vunpack.c.l.b16 %v299
    %v391 = vunpack.c.h.b16 %v299
    %v392 = vunpack.c.l.b16 %v300
    %v393 = vunpack.c.h.b16 %v300
    %v394 = vunpack.c.l.b16 %v301
    %v395 = vunpack.c.h.b16 %v301
    %v396 = vunpack.c.l.b16 %v302
    %v397 = vunpack.c.h.b16 %v302
    %v398 = vunpack.c.l.b16 %v303
    %v399 = vunpack.c.h.b16 %v303
    %v400 = vunpack.c.l.b16 %v304
    %v401 = vunpack.c.h.b16 %v304
    %v402 = vunpack.c.l.b16 %v305
    %v403 = vunpack.c.h.b16 %v305
    %v404 = vunpack.c.l.b16 %v306
    %v405 = vunpack.c.h.b16 %v306
    %v406 = vunpack.c.l.b16 %v307
    %v407 = vunpack.c.h.b16 %v307
    %v408 = vunpack.c.l.b16 %v308
    %v409 = vunpack.c.h.b16 %v308
    %v410 = vunpack.c.l.b16 %v309
    %v411 = vunpack.c.h.b16 %v309
    %v412 = vunpack.c.l.b16 %v310
    %v413 = vunpack.c.h.b16 %v310
    %v414 = vunpack.c.l.b16 %v311
    %v415 = vunpack.c.h.b16 %v311
    %v416 = vunpack.c.l.b16 %v312
    %v417 = vunpack.c.h.b16 %v312
    %v418 = vunpack.c.l.b16 %v313
    %v419 = vunpack.c.h.b16 %v313
    %v420 = vunpack.c.l.b16 %v314
    %v421 = vunpack.c.h.b16 %v314
    %v422 = vunpack.c.l.b16 %v315
    %v423 = vunpack.c.h.b16 %v315
    %v424 = vpack.c.b16 %v362, %v360
    %v425 = vpack.c.b16 %v363, %v361
    %v426 = vpack.c.b16 %v366, %v364
    %v427 = vpack.c.b16 %v367, %v365
    %v428 = vpack.c.b16 %v370, %v368
    %v429 = vpack.c.b16 %v371, %v369
    %v430 = vpack.c.b16 %v374, %v372
    %v431 = vpack.c.b16 %v375, %v373
    %v432 = vpack.c.b16 %v378, %v376
    %v433 = vpack.c.b16 %v379, %v377
    %v434 = vpack.c.b16 %v382, %v380
    %v435 = vpack.c.b16 %v383, %v381
    %v436 = vpack.c.b16 %v386, %v384
    %v437 = vpack.c.b16 %v387, %v385
    %v438 = vpack.c.b16 %v390, %v388
    %v439 = vpack.c.b16 %v391, %v389
    %v440 = vpack.c.b16 %v394, %v392
    %v441 = vpack.c.b16 %v395, %v393
    %v442 = vpack.c.b16 %v398, %v396
    %v443 = vpack.c.b16 %v399, %v397
    %v444 = vpack.c.b16 %v402, %v400
    %v445 = vpack.c.b16 %v403, %v401
    %v446 = vpack.c.b16 %v406, %v404
    %v447 = vpack.c.b16 %v407, %v405
    %v448 = vpack.c.b16 %v410, %v408
    %v449 = vpack.c.b16 %v411, %v409
    %v450 = vpack.c.b16 %v414, %v412
    %v451 = vpack.c.b16 %v415, %v413
    %v452 = vpack.c.b16 %v418, %v416
    %v453 = vpack.c.b16 %v419, %v417
    %v454 = vpack.c.b16 %v422, %v420
    %v455 = vpack.c.b16 %v423, %v421
    %488 = vmatprep.subr.bf16.mxu0 %v425
    %489 = vmatpush1.bf16.msra.mxu0 %v424
    %490 = vmatprep.subr.bf16.mxu0 %v427
    %491 = vmatpush1.bf16.msra.mxu0 %v426
    %492 = vmatprep.subr.bf16.mxu0 %v429
    %493 = vmatpush1.bf16.msra.mxu0 %v428
    %494 = vmatprep.subr.bf16.mxu0 %v431
    %495 = vmatpush1.bf16.msra.mxu0 %v430
    %496 = vmatprep.subr.bf16.mxu0 %v433
    %497 = vmatpush1.bf16.msra.mxu0 %v432
    %498 = vmatprep.subr.bf16.mxu0 %v435
    %499 = vmatpush1.bf16.msra.mxu0 %v434
    %500 = vmatprep.subr.bf16.mxu0 %v437
    %501 = vmatpush1.bf16.msra.mxu0 %v436
    %502 = vmatprep.subr.bf16.mxu0 %v439
    %503 = vmatpush1.bf16.msra.mxu0 %v438
    %504 = vmatprep.subr.bf16.mxu0 %v441
    %505 = vmatpush1.bf16.msra.mxu0 %v440
    %506 = vmatprep.subr.bf16.mxu0 %v443
    %507 = vmatpush1.bf16.msra.mxu0 %v442
    %508 = vmatprep.subr.bf16.mxu0 %v445
    %509 = vmatpush1.bf16.msra.mxu0 %v444
    %510 = vmatprep.subr.bf16.mxu0 %v447
    %511 = vmatpush1.bf16.msra.mxu0 %v446
    %512 = vmatprep.subr.bf16.mxu0 %v449
    %513 = vmatpush1.bf16.msra.mxu0 %v448
    %514 = vmatprep.subr.bf16.mxu0 %v451
    %515 = vmatpush1.bf16.msra.mxu0 %v450
    %516 = vmatprep.subr.bf16.mxu0 %v453
    %517 = vmatpush1.bf16.msra.mxu0 %v452
    %518 = vmatprep.subr.bf16.mxu0 %v455
    %519 = vmatpush1.bf16.msra.mxu0 %v454
    %520 = vmatprep.mubr.bf16.mxu0 %v283
    %521 = vmatmul.mubr.bf16.gmra.mrb[0].mxu0 %v282
    %v522 = vpop.f32.mrb[0].mxu0
    %v523 = vadd.f32 %v321, %v522
    %v524 = vpop.f32.mrb[0].mxu0
    %v525 = vadd.f32 %v325, %v524
    %v526 = vpop.f32.mrb[0].mxu0
    %v527 = vpop.f32.mrb[0].mxu0
    %528 = vdwg.mxu0
    %v529 = vmax.f32 %v523, 0.0
    %v530 = vmax.f32 %v525, 0.0
    %v531 = vpack.c.bf16 %v529, %v529
    %v532 = vpack.c.bf16 %v530, %v530
    %v533 = vld [vmem:[#allocation8] sm:$0xff]
    %v534 = vld [vmem:[#allocation8 + $0x8] sm:$0xff]
    %v535 = vld [vmem:[#allocation8 + $0x10] sm:$0xff]
    %v536 = vld [vmem:[#allocation8 + $0x18] sm:$0xff]
    %v537 = vld [vmem:[#allocation8 + $0x20] sm:$0xff]
    %v538 = vld [vmem:[#allocation8 + $0x28] sm:$0xff]
    %v539 = vld [vmem:[#allocation8 + $0x30] sm:$0xff]
    %v540 = vld [vmem:[#allocation8 + $0x38] sm:$0xff]
    %v541 = vld [vmem:[#allocation8 + $0x40] sm:$0xff]
    %v542 = vld [vmem:[#allocation8 + $0x48] sm:$0xff]
    %v543 = vld [vmem:[#allocation8 + $0x50] sm:$0xff]
    %v544 = vld [vmem:[#allocation8 + $0x58] sm:$0xff]
    %v545 = vld [vmem:[#allocation8 + $0x60] sm:$0xff]
    %v546 = vld [vmem:[#allocation8 + $0x68] sm:$0xff]
    %v547 = vld [vmem:[#allocation8 + $0x70] sm:$0xff]
    %v548 = vld [vmem:[#allocation8 + $0x78] sm:$0xff]
    %v549 = vld [vmem:[#allocation8 + $0x80] sm:$0xff]
    %v550 = vld [vmem:[#allocation8 + $0x88] sm:$0xff]
    %v551 = vld [vmem:[#allocation8 + $0x90] sm:$0xff]
    %v552 = vld [vmem:[#allocation8 + $0x98] sm:$0xff]
    %v553 = vld [vmem:[#allocation8 + $0xa0] sm:$0xff]
    %v554 = vld [vmem:[#allocation8 + $0xa8] sm:$0xff]
    %v555 = vld [vmem:[#allocation8 + $0xb0] sm:$0xff]
    %v556 = vld [vmem:[#allocation8 + $0xb8] sm:$0xff]
    %v557 = vld [vmem:[#allocation8 + $0xc0] sm:$0xff]
    %v558 = vld [vmem:[#allocation8 + $0xc8] sm:$0xff]
    %v559 = vld [vmem:[#allocation8 + $0xd0] sm:$0xff]
    %v560 = vld [vmem:[#allocation8 + $0xd8] sm:$0xff]
    %v561 = vld [vmem:[#allocation8 + $0xe0] sm:$0xff]
    %v562 = vld [vmem:[#allocation8 + $0xe8] sm:$0xff]
    %v563 = vld [vmem:[#allocation8 + $0xf0] sm:$0xff]
    %v564 = vld [vmem:[#allocation8 + $0xf8] sm:$0xff]
    %v565 = vld [vmem:[%s6] sm:$0x3]
    %v567 = vlaneseq
    %v568 = vshrl.u32 %v567, 7
    %v569 = vsub.s32 0, %v568
    %v570 = vrot.slane %v565, %v569
    %v571 = vlaneseq
    %v572 = vshrl.u32 %v571, 7
    %v573 = vsub.s32 1, %v572
    %v574 = vrot.slane %v565, %v573
    %v609 = vunpack.c.l.b16 %v533
    %v610 = vunpack.c.h.b16 %v533
    %v611 = vunpack.c.l.b16 %v534
    %v612 = vunpack.c.h.b16 %v534
    %v613 = vunpack.c.l.b16 %v535
    %v614 = vunpack.c.h.b16 %v535
    %v615 = vunpack.c.l.b16 %v536
    %v616 = vunpack.c.h.b16 %v536
    %v617 = vunpack.c.l.b16 %v537
    %v618 = vunpack.c.h.b16 %v537
    %v619 = vunpack.c.l.b16 %v538
    %v620 = vunpack.c.h.b16 %v538
    %v621 = vunpack.c.l.b16 %v539
    %v622 = vunpack.c.h.b16 %v539
    %v623 = vunpack.c.l.b16 %v540
    %v624 = vunpack.c.h.b16 %v540
    %v625 = vunpack.c.l.b16 %v541
    %v626 = vunpack.c.h.b16 %v541
    %v627 = vunpack.c.l.b16 %v542
    %v628 = vunpack.c.h.b16 %v542
    %v629 = vunpack.c.l.b16 %v543
    %v630 = vunpack.c.h.b16 %v543
    %v631 = vunpack.c.l.b16 %v544
    %v632 = vunpack.c.h.b16 %v544
    %v633 = vunpack.c.l.b16 %v545
    %v634 = vunpack.c.h.b16 %v545
    %v635 = vunpack.c.l.b16 %v546
    %v636 = vunpack.c.h.b16 %v546
    %v637 = vunpack.c.l.b16 %v547
    %v638 = vunpack.c.h.b16 %v547
    %v639 = vunpack.c.l.b16 %v548
    %v640 = vunpack.c.h.b16 %v548
    %v641 = vunpack.c.l.b16 %v549
    %v642 = vunpack.c.h.b16 %v549
    %v643 = vunpack.c.l.b16 %v550
    %v644 = vunpack.c.h.b16 %v550
    %v645 = vunpack.c.l.b16 %v551
    %v646 = vunpack.c.h.b16 %v551
    %v647 = vunpack.c.l.b16 %v552
    %v648 = vunpack.c.h.b16 %v552
    %v649 = vunpack.c.l.b16 %v553
    %v650 = vunpack.c.h.b16 %v553
    %v651 = vunpack.c.l.b16 %v554
    %v652 = vunpack.c.h.b16 %v554
    %v653 = vunpack.c.l.b16 %v555
    %v654 = vunpack.c.h.b16 %v555
    %v655 = vunpack.c.l.b16 %v556
    %v656 = vunpack.c.h.b16 %v556
    %v657 = vunpack.c.l.b16 %v557
    %v658 = vunpack.c.h.b16 %v557
    %v659 = vunpack.c.l.b16 %v558
    %v660 = vunpack.c.h.b16 %v558
    %v661 = vunpack.c.l.b16 %v559
    %v662 = vunpack.c.h.b16 %v559
    %v663 = vunpack.c.l.b16 %v560
    %v664 = vunpack.c.h.b16 %v560
    %v665 = vunpack.c.l.b16 %v561
    %v666 = vunpack.c.h.b16 %v561
    %v667 = vunpack.c.l.b16 %v562
    %v668 = vunpack.c.h.b16 %v562
    %v669 = vunpack.c.l.b16 %v563
    %v670 = vunpack.c.h.b16 %v563
    %v671 = vunpack.c.l.b16 %v564
    %v672 = vunpack.c.h.b16 %v564
    %v673 = vpack.c.b16 %v611, %v609
    %v674 = vpack.c.b16 %v612, %v610
    %v675 = vpack.c.b16 %v615, %v613
    %v676 = vpack.c.b16 %v616, %v614
    %v677 = vpack.c.b16 %v619, %v617
    %v678 = vpack.c.b16 %v620, %v618
    %v679 = vpack.c.b16 %v623, %v621
    %v680 = vpack.c.b16 %v624, %v622
    %v681 = vpack.c.b16 %v627, %v625
    %v682 = vpack.c.b16 %v628, %v626
    %v683 = vpack.c.b16 %v631, %v629
    %v684 = vpack.c.b16 %v632, %v630
    %v685 = vpack.c.b16 %v635, %v633
    %v686 = vpack.c.b16 %v636, %v634
    %v687 = vpack.c.b16 %v639, %v637
    %v688 = vpack.c.b16 %v640, %v638
    %v689 = vpack.c.b16 %v643, %v641
    %v690 = vpack.c.b16 %v644, %v642
    %v691 = vpack.c.b16 %v647, %v645
    %v692 = vpack.c.b16 %v648, %v646
    %v693 = vpack.c.b16 %v651, %v649
    %v694 = vpack.c.b16 %v652, %v650
    %v695 = vpack.c.b16 %v655, %v653
    %v696 = vpack.c.b16 %v656, %v654
    %v697 = vpack.c.b16 %v659, %v657
    %v698 = vpack.c.b16 %v660, %v658
    %v699 = vpack.c.b16 %v663, %v661
    %v700 = vpack.c.b16 %v664, %v662
    %v701 = vpack.c.b16 %v667, %v665
    %v702 = vpack.c.b16 %v668, %v666
    %v703 = vpack.c.b16 %v671, %v669
    %v704 = vpack.c.b16 %v672, %v670
    %737 = vmatprep.subr.bf16.mxu0 %v674
    %738 = vmatpush1.bf16.msra.mxu0 %v673
    %739 = vmatprep.subr.bf16.mxu0 %v676
    %740 = vmatpush1.bf16.msra.mxu0 %v675
    %741 = vmatprep.subr.bf16.mxu0 %v678
    %742 = vmatpush1.bf16.msra.mxu0 %v677
    %743 = vmatprep.subr.bf16.mxu0 %v680
    %744 = vmatpush1.bf16.msra.mxu0 %v679
    %745 = vmatprep.subr.bf16.mxu0 %v682
    %746 = vmatpush1.bf16.msra.mxu0 %v681
    %747 = vmatprep.subr.bf16.mxu0 %v684
    %748 = vmatpush1.bf16.msra.mxu0 %v683
    %749 = vmatprep.subr.bf16.mxu0 %v686
    %750 = vmatpush1.bf16.msra.mxu0 %v685
    %751 = vmatprep.subr.bf16.mxu0 %v688
    %752 = vmatpush1.bf16.msra.mxu0 %v687
    %753 = vmatprep.subr.bf16.mxu0 %v690
    %754 = vmatpush1.bf16.msra.mxu0 %v689
    %755 = vmatprep.subr.bf16.mxu0 %v692
    %756 = vmatpush1.bf16.msra.mxu0 %v691
    %757 = vmatprep.subr.bf16.mxu0 %v694
    %758 = vmatpush1.bf16.msra.mxu0 %v693
    %759 = vmatprep.subr.bf16.mxu0 %v696
    %760 = vmatpush1.bf16.msra.mxu0 %v695
    %761 = vmatprep.subr.bf16.mxu0 %v698
    %762 = vmatpush1.bf16.msra.mxu0 %v697
    %763 = vmatprep.subr.bf16.mxu0 %v700
    %764 = vmatpush1.bf16.msra.mxu0 %v699
    %765 = vmatprep.subr.bf16.mxu0 %v702
    %766 = vmatpush1.bf16.msra.mxu0 %v701
    %767 = vmatprep.subr.bf16.mxu0 %v704
    %768 = vmatpush1.bf16.msra.mxu0 %v703
    %769 = vmatprep.mubr.bf16.mxu0 %v532
    %770 = vmatmul.mubr.bf16.gmra.mrb[0].mxu0 %v531
    %v771 = vpop.f32.mrb[0].mxu0
    %v772 = vadd.f32 %v570, %v771
    %v773 = vpop.f32.mrb[0].mxu0
    %v774 = vadd.f32 %v574, %v773
    %v775 = vpop.f32.mrb[0].mxu0
    %v776 = vpop.f32.mrb[0].mxu0
    %777 = vdwg.mxu0
    %v778 = vmax.f32 %v772, 0.0
    %v779 = vmax.f32 %v774, 0.0
    %v780 = vpack.c.bf16 %v778, %v778
    %v781 = vpack.c.bf16 %v779, %v779
    %v782 = vld [vmem:[#allocation10] sm:$0xff]
    %v783 = vld [vmem:[#allocation10 + $0x8] sm:$0xff]
    %v784 = vld [vmem:[#allocation10 + $0x10] sm:$0xff]
    %v785 = vld [vmem:[#allocation10 + $0x18] sm:$0xff]
    %v786 = vld [vmem:[#allocation10 + $0x20] sm:$0xff]
    %v787 = vld [vmem:[#allocation10 + $0x28] sm:$0xff]
    %v788 = vld [vmem:[#allocation10 + $0x30] sm:$0xff]
    %v789 = vld [vmem:[#allocation10 + $0x38] sm:$0xff]
    %v790 = vld [vmem:[#allocation10 + $0x40] sm:$0xff]
    %v791 = vld [vmem:[#allocation10 + $0x48] sm:$0xff]
    %v792 = vld [vmem:[#allocation10 + $0x50] sm:$0xff]
    %v793 = vld [vmem:[#allocation10 + $0x58] sm:$0xff]
    %v794 = vld [vmem:[#allocation10 + $0x60] sm:$0xff]
    %v795 = vld [vmem:[#allocation10 + $0x68] sm:$0xff]
    %v796 = vld [vmem:[#allocation10 + $0x70] sm:$0xff]
    %v797 = vld [vmem:[#allocation10 + $0x78] sm:$0xff]
    %v798 = vld [vmem:[#allocation10 + $0x80] sm:$0xff]
    %v799 = vld [vmem:[#allocation10 + $0x88] sm:$0xff]
    %v800 = vld [vmem:[#allocation10 + $0x90] sm:$0xff]
    %v801 = vld [vmem:[#allocation10 + $0x98] sm:$0xff]
    %v802 = vld [vmem:[#allocation10 + $0xa0] sm:$0xff]
    %v803 = vld [vmem:[#allocation10 + $0xa8] sm:$0xff]
    %v804 = vld [vmem:[#allocation10 + $0xb0] sm:$0xff]
    %v805 = vld [vmem:[#allocation10 + $0xb8] sm:$0xff]
    %v806 = vld [vmem:[#allocation10 + $0xc0] sm:$0xff]
    %v807 = vld [vmem:[#allocation10 + $0xc8] sm:$0xff]
    %v808 = vld [vmem:[#allocation10 + $0xd0] sm:$0xff]
    %v809 = vld [vmem:[#allocation10 + $0xd8] sm:$0xff]
    %v810 = vld [vmem:[#allocation10 + $0xe0] sm:$0xff]
    %v811 = vld [vmem:[#allocation10 + $0xe8] sm:$0xff]
    %v812 = vld [vmem:[#allocation10 + $0xf0] sm:$0xff]
    %v813 = vld [vmem:[#allocation10 + $0xf8] sm:$0xff]
    %v814 = vld [vmem:[%s8] sm:$0x3]
    %v816 = vlaneseq
    %v817 = vshrl.u32 %v816, 7
    %v818 = vsub.s32 0, %v817
    %v819 = vrot.slane %v814, %v818
    %v820 = vlaneseq
    %v821 = vshrl.u32 %v820, 7
    %v822 = vsub.s32 1, %v821
    %v823 = vrot.slane %v814, %v822
    %v858 = vunpack.c.l.b16 %v782
    %v859 = vunpack.c.h.b16 %v782
    %v860 = vunpack.c.l.b16 %v783
    %v861 = vunpack.c.h.b16 %v783
    %v862 = vunpack.c.l.b16 %v784
    %v863 = vunpack.c.h.b16 %v784
    %v864 = vunpack.c.l.b16 %v785
    %v865 = vunpack.c.h.b16 %v785
    %v866 = vunpack.c.l.b16 %v786
    %v867 = vunpack.c.h.b16 %v786
    %v868 = vunpack.c.l.b16 %v787
    %v869 = vunpack.c.h.b16 %v787
    %v870 = vunpack.c.l.b16 %v788
    %v871 = vunpack.c.h.b16 %v788
    %v872 = vunpack.c.l.b16 %v789
    %v873 = vunpack.c.h.b16 %v789
    %v874 = vunpack.c.l.b16 %v790
    %v875 = vunpack.c.h.b16 %v790
    %v876 = vunpack.c.l.b16 %v791
    %v877 = vunpack.c.h.b16 %v791
    %v878 = vunpack.c.l.b16 %v792
    %v879 = vunpack.c.h.b16 %v792
    %v880 = vunpack.c.l.b16 %v793
    %v881 = vunpack.c.h.b16 %v793
    %v882 = vunpack.c.l.b16 %v794
    %v883 = vunpack.c.h.b16 %v794
    %v884 = vunpack.c.l.b16 %v795
    %v885 = vunpack.c.h.b16 %v795
    %v886 = vunpack.c.l.b16 %v796
    %v887 = vunpack.c.h.b16 %v796
    %v888 = vunpack.c.l.b16 %v797
    %v889 = vunpack.c.h.b16 %v797
    %v890 = vunpack.c.l.b16 %v798
    %v891 = vunpack.c.h.b16 %v798
    %v892 = vunpack.c.l.b16 %v799
    %v893 = vunpack.c.h.b16 %v799
    %v894 = vunpack.c.l.b16 %v800
    %v895 = vunpack.c.h.b16 %v800
    %v896 = vunpack.c.l.b16 %v801
    %v897 = vunpack.c.h.b16 %v801
    %v898 = vunpack.c.l.b16 %v802
    %v899 = vunpack.c.h.b16 %v802
    %v900 = vunpack.c.l.b16 %v803
    %v901 = vunpack.c.h.b16 %v803
    %v902 = vunpack.c.l.b16 %v804
    %v903 = vunpack.c.h.b16 %v804
    %v904 = vunpack.c.l.b16 %v805
    %v905 = vunpack.c.h.b16 %v805
    %v906 = vunpack.c.l.b16 %v806
    %v907 = vunpack.c.h.b16 %v806
    %v908 = vunpack.c.l.b16 %v807
    %v909 = vunpack.c.h.b16 %v807
    %v910 = vunpack.c.l.b16 %v808
    %v911 = vunpack.c.h.b16 %v808
    %v912 = vunpack.c.l.b16 %v809
    %v913 = vunpack.c.h.b16 %v809
    %v914 = vunpack.c.l.b16 %v810
    %v915 = vunpack.c.h.b16 %v810
    %v916 = vunpack.c.l.b16 %v811
    %v917 = vunpack.c.h.b16 %v811
    %v918 = vunpack.c.l.b16 %v812
    %v919 = vunpack.c.h.b16 %v812
    %v920 = vunpack.c.l.b16 %v813
    %v921 = vunpack.c.h.b16 %v813
    %v922 = vpack.c.b16 %v860, %v858
    %v923 = vpack.c.b16 %v861, %v859
    %v924 = vpack.c.b16 %v864, %v862
    %v925 = vpack.c.b16 %v865, %v863
    %v926 = vpack.c.b16 %v868, %v866
    %v927 = vpack.c.b16 %v869, %v867
    %v928 = vpack.c.b16 %v872, %v870
    %v929 = vpack.c.b16 %v873, %v871
    %v930 = vpack.c.b16 %v876, %v874
    %v931 = vpack.c.b16 %v877, %v875
    %v932 = vpack.c.b16 %v880, %v878
    %v933 = vpack.c.b16 %v881, %v879
    %v934 = vpack.c.b16 %v884, %v882
    %v935 = vpack.c.b16 %v885, %v883
    %v936 = vpack.c.b16 %v888, %v886
    %v937 = vpack.c.b16 %v889, %v887
    %v938 = vpack.c.b16 %v892, %v890
    %v939 = vpack.c.b16 %v893, %v891
    %v940 = vpack.c.b16 %v896, %v894
    %v941 = vpack.c.b16 %v897, %v895
    %v942 = vpack.c.b16 %v900, %v898
    %v943 = vpack.c.b16 %v901, %v899
    %v944 = vpack.c.b16 %v904, %v902
    %v945 = vpack.c.b16 %v905, %v903
    %v946 = vpack.c.b16 %v908, %v906
    %v947 = vpack.c.b16 %v909, %v907
    %v948 = vpack.c.b16 %v912, %v910
    %v949 = vpack.c.b16 %v913, %v911
    %v950 = vpack.c.b16 %v916, %v914
    %v951 = vpack.c.b16 %v917, %v915
    %v952 = vpack.c.b16 %v920, %v918
    %v953 = vpack.c.b16 %v921, %v919
    %986 = vmatprep.subr.bf16.mxu0 %v923
    %987 = vmatpush1.bf16.msra.mxu0 %v922
    %988 = vmatprep.subr.bf16.mxu0 %v925
    %989 = vmatpush1.bf16.msra.mxu0 %v924
    %990 = vmatprep.subr.bf16.mxu0 %v927
    %991 = vmatpush1.bf16.msra.mxu0 %v926
    %992 = vmatprep.subr.bf16.mxu0 %v929
    %993 = vmatpush1.bf16.msra.mxu0 %v928
    %994 = vmatprep.subr.bf16.mxu0 %v931
    %995 = vmatpush1.bf16.msra.mxu0 %v930
    %996 = vmatprep.subr.bf16.mxu0 %v933
    %997 = vmatpush1.bf16.msra.mxu0 %v932
    %998 = vmatprep.subr.bf16.mxu0 %v935
    %999 = vmatpush1.bf16.msra.mxu0 %v934
    %1000 = vmatprep.subr.bf16.mxu0 %v937
    %1001 = vmatpush1.bf16.msra.mxu0 %v936
    %1002 = vmatprep.subr.bf16.mxu0 %v939
    %1003 = vmatpush1.bf16.msra.mxu0 %v938
    %1004 = vmatprep.subr.bf16.mxu0 %v941
    %1005 = vmatpush1.bf16.msra.mxu0 %v940
    %1006 = vmatprep.subr.bf16.mxu0 %v943
    %1007 = vmatpush1.bf16.msra.mxu0 %v942
    %1008 = vmatprep.subr.bf16.mxu0 %v945
    %1009 = vmatpush1.bf16.msra.mxu0 %v944
    %1010 = vmatprep.subr.bf16.mxu0 %v947
    %1011 = vmatpush1.bf16.msra.mxu0 %v946
    %1012 = vmatprep.subr.bf16.mxu0 %v949
    %1013 = vmatpush1.bf16.msra.mxu0 %v948
    %1014 = vmatprep.subr.bf16.mxu0 %v951
    %1015 = vmatpush1.bf16.msra.mxu0 %v950
    %1016 = vmatprep.subr.bf16.mxu0 %v953
    %1017 = vmatpush1.bf16.msra.mxu0 %v952
    %1018 = vmatprep.mubr.bf16.mxu0 %v781
    %1019 = vmatmul.mubr.bf16.gmra.mrb[0].mxu0 %v780
    %v1020 = vpop.f32.mrb[0].mxu0
    %v1021 = vadd.f32 %v819, %v1020
    %v1022 = vpop.f32.mrb[0].mxu0
    %v1023 = vadd.f32 %v823, %v1022
    %v1024 = vpop.f32.mrb[0].mxu0
    %v1025 = vpop.f32.mrb[0].mxu0
    %1026 = vdwg.mxu0
    %v1027 = vmax.f32 %v1021, 0.0
    %v1028 = vmax.f32 %v1023, 0.0
    %v1029 = vpack.c.bf16 %v1027, %v1027
    %v1030 = vpack.c.bf16 %v1028, %v1028
    %v1031 = vld [vmem:[#allocation11] sm:$0xff]
    %v1032 = vld [vmem:[#allocation11 + $0x8] sm:$0xff]
    %v1033 = vld [vmem:[#allocation11 + $0x10] sm:$0xff]
    %v1034 = vld [vmem:[#allocation11 + $0x18] sm:$0xff]
    %v1035 = vld [vmem:[#allocation11 + $0x20] sm:$0xff]
    %v1036 = vld [vmem:[#allocation11 + $0x28] sm:$0xff]
    %v1037 = vld [vmem:[#allocation11 + $0x30] sm:$0xff]
    %v1038 = vld [vmem:[#allocation11 + $0x38] sm:$0xff]
    %v1039 = vld [vmem:[#allocation11 + $0x40] sm:$0xff]
    %v1040 = vld [vmem:[#allocation11 + $0x48] sm:$0xff]
    %v1041 = vld [vmem:[#allocation11 + $0x50] sm:$0xff]
    %v1042 = vld [vmem:[#allocation11 + $0x58] sm:$0xff]
    %v1043 = vld [vmem:[#allocation11 + $0x60] sm:$0xff]
    %v1044 = vld [vmem:[#allocation11 + $0x68] sm:$0xff]
    %v1045 = vld [vmem:[#allocation11 + $0x70] sm:$0xff]
    %v1046 = vld [vmem:[#allocation11 + $0x78] sm:$0xff]
    %v1047 = vld [vmem:[#allocation11 + $0x80] sm:$0xff]
    %v1048 = vld [vmem:[#allocation11 + $0x88] sm:$0xff]
    %v1049 = vld [vmem:[#allocation11 + $0x90] sm:$0xff]
    %v1050 = vld [vmem:[#allocation11 + $0x98] sm:$0xff]
    %v1051 = vld [vmem:[#allocation11 + $0xa0] sm:$0xff]
    %v1052 = vld [vmem:[#allocation11 + $0xa8] sm:$0xff]
    %v1053 = vld [vmem:[#allocation11 + $0xb0] sm:$0xff]
    %v1054 = vld [vmem:[#allocation11 + $0xb8] sm:$0xff]
    %v1055 = vld [vmem:[#allocation11 + $0xc0] sm:$0xff]
    %v1056 = vld [vmem:[#allocation11 + $0xc8] sm:$0xff]
    %v1057 = vld [vmem:[#allocation11 + $0xd0] sm:$0xff]
    %v1058 = vld [vmem:[#allocation11 + $0xd8] sm:$0xff]
    %v1059 = vld [vmem:[#allocation11 + $0xe0] sm:$0xff]
    %v1060 = vld [vmem:[#allocation11 + $0xe8] sm:$0xff]
    %v1061 = vld [vmem:[#allocation11 + $0xf0] sm:$0xff]
    %v1062 = vld [vmem:[#allocation11 + $0xf8] sm:$0xff]
    %v1063 = vld [vmem:[%s10] sm:$0x3]
    %v1065 = vlaneseq
    %v1066 = vshrl.u32 %v1065, 7
    %v1067 = vsub.s32 0, %v1066
    %v1068 = vrot.slane %v1063, %v1067
    %v1069 = vlaneseq
    %v1070 = vshrl.u32 %v1069, 7
    %v1071 = vsub.s32 1, %v1070
    %v1072 = vrot.slane %v1063, %v1071
    %v1107 = vunpack.c.l.b16 %v1031
    %v1108 = vunpack.c.h.b16 %v1031
    %v1109 = vunpack.c.l.b16 %v1032
    %v1110 = vunpack.c.h.b16 %v1032
    %v1111 = vunpack.c.l.b16 %v1033
    %v1112 = vunpack.c.h.b16 %v1033
    %v1113 = vunpack.c.l.b16 %v1034
    %v1114 = vunpack.c.h.b16 %v1034
    %v1115 = vunpack.c.l.b16 %v1035
    %v1116 = vunpack.c.h.b16 %v1035
    %v1117 = vunpack.c.l.b16 %v1036
    %v1118 = vunpack.c.h.b16 %v1036
    %v1119 = vunpack.c.l.b16 %v1037
    %v1120 = vunpack.c.h.b16 %v1037
    %v1121 = vunpack.c.l.b16 %v1038
    %v1122 = vunpack.c.h.b16 %v1038
    %v1123 = vunpack.c.l.b16 %v1039
    %v1124 = vunpack.c.h.b16 %v1039
    %v1125 = vunpack.c.l.b16 %v1040
    %v1126 = vunpack.c.h.b16 %v1040
    %v1127 = vunpack.c.l.b16 %v1041
    %v1128 = vunpack.c.h.b16 %v1041
    %v1129 = vunpack.c.l.b16 %v1042
    %v1130 = vunpack.c.h.b16 %v1042
    %v1131 = vunpack.c.l.b16 %v1043
    %v1132 = vunpack.c.h.b16 %v1043
    %v1133 = vunpack.c.l.b16 %v1044
    %v1134 = vunpack.c.h.b16 %v1044
    %v1135 = vunpack.c.l.b16 %v1045
    %v1136 = vunpack.c.h.b16 %v1045
    %v1137 = vunpack.c.l.b16 %v1046
    %v1138 = vunpack.c.h.b16 %v1046
    %v1139 = vunpack.c.l.b16 %v1047
    %v1140 = vunpack.c.h.b16 %v1047
    %v1141 = vunpack.c.l.b16 %v1048
    %v1142 = vunpack.c.h.b16 %v1048
    %v1143 = vunpack.c.l.b16 %v1049
    %v1144 = vunpack.c.h.b16 %v1049
    %v1145 = vunpack.c.l.b16 %v1050
    %v1146 = vunpack.c.h.b16 %v1050
    %v1147 = vunpack.c.l.b16 %v1051
    %v1148 = vunpack.c.h.b16 %v1051
    %v1149 = vunpack.c.l.b16 %v1052
    %v1150 = vunpack.c.h.b16 %v1052
    %v1151 = vunpack.c.l.b16 %v1053
    %v1152 = vunpack.c.h.b16 %v1053
    %v1153 = vunpack.c.l.b16 %v1054
    %v1154 = vunpack.c.h.b16 %v1054
    %v1155 = vunpack.c.l.b16 %v1055
    %v1156 = vunpack.c.h.b16 %v1055
    %v1157 = vunpack.c.l.b16 %v1056
    %v1158 = vunpack.c.h.b16 %v1056
    %v1159 = vunpack.c.l.b16 %v1057
    %v1160 = vunpack.c.h.b16 %v1057
    %v1161 = vunpack.c.l.b16 %v1058
    %v1162 = vunpack.c.h.b16 %v1058
    %v1163 = vunpack.c.l.b16 %v1059
    %v1164 = vunpack.c.h.b16 %v1059
    %v1165 = vunpack.c.l.b16 %v1060
    %v1166 = vunpack.c.h.b16 %v1060
    %v1167 = vunpack.c.l.b16 %v1061
    %v1168 = vunpack.c.h.b16 %v1061
    %v1169 = vunpack.c.l.b16 %v1062
    %v1170 = vunpack.c.h.b16 %v1062
    %v1171 = vpack.c.b16 %v1109, %v1107
    %v1172 = vpack.c.b16 %v1110, %v1108
    %v1173 = vpack.c.b16 %v1113, %v1111
    %v1174 = vpack.c.b16 %v1114, %v1112
    %v1175 = vpack.c.b16 %v1117, %v1115
    %v1176 = vpack.c.b16 %v1118, %v1116
    %v1177 = vpack.c.b16 %v1121, %v1119
    %v1178 = vpack.c.b16 %v1122, %v1120
    %v1179 = vpack.c.b16 %v1125, %v1123
    %v1180 = vpack.c.b16 %v1126, %v1124
    %v1181 = vpack.c.b16 %v1129, %v1127
    %v1182 = vpack.c.b16 %v1130, %v1128
    %v1183 = vpack.c.b16 %v1133, %v1131
    %v1184 = vpack.c.b16 %v1134, %v1132
    %v1185 = vpack.c.b16 %v1137, %v1135
    %v1186 = vpack.c.b16 %v1138, %v1136
    %v1187 = vpack.c.b16 %v1141, %v1139
    %v1188 = vpack.c.b16 %v1142, %v1140
    %v1189 = vpack.c.b16 %v1145, %v1143
    %v1190 = vpack.c.b16 %v1146, %v1144
    %v1191 = vpack.c.b16 %v1149, %v1147
    %v1192 = vpack.c.b16 %v1150, %v1148
    %v1193 = vpack.c.b16 %v1153, %v1151
    %v1194 = vpack.c.b16 %v1154, %v1152
    %v1195 = vpack.c.b16 %v1157, %v1155
    %v1196 = vpack.c.b16 %v1158, %v1156
    %v1197 = vpack.c.b16 %v1161, %v1159
    %v1198 = vpack.c.b16 %v1162, %v1160
    %v1199 = vpack.c.b16 %v1165, %v1163
    %v1200 = vpack.c.b16 %v1166, %v1164
    %v1201 = vpack.c.b16 %v1169, %v1167
    %v1202 = vpack.c.b16 %v1170, %v1168
    %1235 = vmatprep.subr.bf16.mxu0 %v1172
    %1236 = vmatpush1.bf16.msra.mxu0 %v1171
    %1237 = vmatprep.subr.bf16.mxu0 %v1174
    %1238 = vmatpush1.bf16.msra.mxu0 %v1173
    %1239 = vmatprep.subr.bf16.mxu0 %v1176
    %1240 = vmatpush1.bf16.msra.mxu0 %v1175
    %1241 = vmatprep.subr.bf16.mxu0 %v1178
    %1242 = vmatpush1.bf16.msra.mxu0 %v1177
    %1243 = vmatprep.subr.bf16.mxu0 %v1180
    %1244 = vmatpush1.bf16.msra.mxu0 %v1179
    %1245 = vmatprep.subr.bf16.mxu0 %v1182
    %1246 = vmatpush1.bf16.msra.mxu0 %v1181
    %1247 = vmatprep.subr.bf16.mxu0 %v1184
    %1248 = vmatpush1.bf16.msra.mxu0 %v1183
    %1249 = vmatprep.subr.bf16.mxu0 %v1186
    %1250 = vmatpush1.bf16.msra.mxu0 %v1185
    %1251 = vmatprep.subr.bf16.mxu0 %v1188
    %1252 = vmatpush1.bf16.msra.mxu0 %v1187
    %1253 = vmatprep.subr.bf16.mxu0 %v1190
    %1254 = vmatpush1.bf16.msra.mxu0 %v1189
    %1255 = vmatprep.subr.bf16.mxu0 %v1192
    %1256 = vmatpush1.bf16.msra.mxu0 %v1191
    %1257 = vmatprep.subr.bf16.mxu0 %v1194
    %1258 = vmatpush1.bf16.msra.mxu0 %v1193
    %1259 = vmatprep.subr.bf16.mxu0 %v1196
    %1260 = vmatpush1.bf16.msra.mxu0 %v1195
    %1261 = vmatprep.subr.bf16.mxu0 %v1198
    %1262 = vmatpush1.bf16.msra.mxu0 %v1197
    %1263 = vmatprep.subr.bf16.mxu0 %v1200
    %1264 = vmatpush1.bf16.msra.mxu0 %v1199
    %1265 = vmatprep.subr.bf16.mxu0 %v1202
    %1266 = vmatpush1.bf16.msra.mxu0 %v1201
    %1267 = vmatprep.mubr.bf16.mxu0 %v1030
    %1268 = vmatmul.mubr.bf16.gmra.mrb[0].mxu0 %v1029
    %v1269 = vpop.f32.mrb[0].mxu0
    %v1270 = vadd.f32 %v1068, %v1269
    %v1271 = vpop.f32.mrb[0].mxu0
    %v1272 = vadd.f32 %v1072, %v1271
    %v1273 = vpop.f32.mrb[0].mxu0
    %v1274 = vpop.f32.mrb[0].mxu0
    %1275 = vdwg.mxu0
    %v1276 = vmax.f32 %v1270, 0.0
    %v1277 = vmax.f32 %v1272, 0.0
    %v1278 = vpack.c.bf16 %v1276, %v1276
    %v1279 = vpack.c.bf16 %v1277, %v1277
    %v1280 = vld [vmem:[%s11] sm:$0xff]
    %v1281 = vld [vmem:[%s12] sm:$0xff]
    %1283 = vset.pattern.permute.xlu0 0
    %1284 = vperm.xlu0 %1283, %v1281
    %v1285 = vpop.permute.xlu0 %1284
    %v1288 = vunpack.c.l.b16 %v1280
    %v1289 = vunpack.c.h.b16 %v1280
    %v1290 = vpack.c.b16 %v1288, %v1288
    %v1291 = vpack.c.b16 %v1289, %v1289
    %1294 = vmatprep.subr.bf16.mxu0 %v1279
    %1295 = vmatpush1.bf16.xpose.msra.mxu0 %v1278
    %1296 = vmatprep.subr.bf16.mxu0 0
    %1297 = vmatpush1.bf16.xpose.msra.mxu0 0
    %1298 = vmatprep.subr.bf16.mxu0 0
    %1299 = vmatpush1.bf16.xpose.msra.mxu0 0
    %1300 = vmatprep.subr.bf16.mxu0 0
    %1301 = vmatpush1.bf16.xpose.msra.mxu0 0
    %1302 = vmatprep.subr.bf16.mxu0 0
    %1303 = vmatpush1.bf16.xpose.msra.mxu0 0
    %1304 = vmatprep.subr.bf16.mxu0 0
    %1305 = vmatpush1.bf16.xpose.msra.mxu0 0
    %1306 = vmatprep.subr.bf16.mxu0 0
    %1307 = vmatpush1.bf16.xpose.msra.mxu0 0
    %1308 = vmatprep.subr.bf16.mxu0 0
    %1309 = vmatpush1.bf16.xpose.msra.mxu0 0
    %1310 = vmatprep.subr.bf16.mxu0 0
    %1311 = vmatpush1.bf16.xpose.msra.mxu0 0
    %1312 = vmatprep.subr.bf16.mxu0 0
    %1313 = vmatpush1.bf16.xpose.msra.mxu0 0
    %1314 = vmatprep.subr.bf16.mxu0 0
    %1315 = vmatpush1.bf16.xpose.msra.mxu0 0
    %1316 = vmatprep.subr.bf16.mxu0 0
    %1317 = vmatpush1.bf16.xpose.msra.mxu0 0
    %1318 = vmatprep.subr.bf16.mxu0 0
    %1319 = vmatpush1.bf16.xpose.msra.mxu0 0
    %1320 = vmatprep.subr.bf16.mxu0 0
    %1321 = vmatpush1.bf16.xpose.msra.mxu0 0
    %1322 = vmatprep.subr.bf16.mxu0 0
    %1323 = vmatpush1.bf16.xpose.msra.mxu0 0
    %1324 = vmatprep.subr.bf16.mxu0 0
    %1325 = vmatpush1.bf16.xpose.msra.mxu0 0
    %1326 = vmatprep.mubr.bf16.mxu0 %v1291
    %1327 = vmatmul.mubr.bf16.gmra.mrb[0].mxu0 %v1290
    %v1328 = vpop.f32.mrb[0].mxu0
    %v1329 = vadd.f32 %v1285, %v1328
    %v1330 = vpop.f32.mrb[0].mxu0
    %v1331 = vpop.f32.mrb[0].mxu0
    %v1332 = vpop.f32.mrb[0].mxu0
    %1333 = vdwg.mxu0
    %vm1334 = vcmask 64512
    %1335 = vst.msk [vmem:[%s13] sm:$0xff] %vm1334, %v1329
    // Predicated region
    $region78: #{mlp_forward.1} parent=1 // pred_check
      _
    $region79: #{mlp_forward.1} parent=1 // pred_check_branch
      %1337 = sbr.rel (0) target = $region81
    $region80: #{mlp_forward.1} parent=1 // pred_region
      _
    $region81: #{mlp_forward.1} parent=1 // pred_fallthru
      _
    // Predicated region
    $region82: #{mlp_forward.1} parent=1 // pred_check
      _
    $region83: #{mlp_forward.1} parent=1 // pred_check_branch
      %1339 = sbr.rel (0) target = $region85
    $region84: #{mlp_forward.1} parent=1 // pred_region
      _
    $region85: #{mlp_forward.1} parent=1 // pred_fallthru
      _
    %1340 = vsyncpa [#allocation4], 1
    %1341 = vsyncpa [#allocation6], 1
    %1342 = vsyncpa [#allocation9], 1
    %1343 = vsyncpa [#allocation12], 1

</llo_original>
